<compile_context>
chip_gen: v6e
topology: v6e:2x2x1
jax: 0.10.0
libtpu: 0.0.40
codegen_flags: <defaults>
</compile_context>

<pallas_src>
import jax
import jax.numpy as jnp
from jax.experimental import pallas as pl
from jax.experimental.pallas import tpu as pltpu


def _testnet2_kernel(x1_ref, x2_ref, o_ref):
    # Closed form of the unrolled double loop (FP reassociation is ulp-level).
    dt = x1_ref.dtype
    six = jnp.asarray(6, dtype=dt)
    c31 = jnp.asarray(31, dtype=dt)
    o_ref[...] = (x1_ref[...] + x2_ref[...] * six + c31).astype(o_ref.dtype)


LANE = 128
# ~1 MiB per input per block (= 512x512 f32 tile): measured ~85% of the HBM
# roofline on v6e; going bigger gains ~1% but risks v5e's 16 MiB scoped VMEM.
_TILE_BYTES_PER_INPUT = 1 << 20


def _choose_width(n: int) -> int:
    """Widest multiple of 128 (<=1024) dividing n, preferring rows % 8 == 0."""
    candidates = [w for w in (1024, 512, 256, 128) if n % w == 0]
    assert candidates, "element count must be a multiple of 128"
    for w in candidates:  # lane density is guaranteed; keep sublane density too
        if (n // w) % 8 == 0:
            return w
    return candidates[0]


def _choose_tile_rows(rows: int, width: int, itemsize: int) -> int:
    """Rows per tile: ~1 MiB/input blocks, divisor of rows, even block count."""
    cap = _TILE_BYTES_PER_INPUT // (width * itemsize)
    cap = max(8, min(512, (cap // 8) * 8))
    if rows <= cap:
        return rows  # grid of 1 degrades gracefully
    fallback = None
    for tm in range(cap, 7, -8):
        if rows % tm == 0:
            if (rows // tm) % 2 == 0:  # even block count: v7x 2-TC balance
                return tm
            if fallback is None:
                fallback = tm
    return fallback if fallback is not None else cap  # ragged last block


@jax.jit
def testnet2_forward(x1, x2):
    assert x1.shape == x2.shape
    assert x1.dtype == x2.dtype
    orig_shape = x1.shape
    n = x1.size
    assert n % LANE == 0, "example sizes chosen to be 128-divisible"

    width = _choose_width(n)
    rows = n // width
    x1_2d = x1.reshape(rows, width)
    x2_2d = x2.reshape(rows, width)

    tm = _choose_tile_rows(rows, width, x1.dtype.itemsize)
    num_blocks = pl.cdiv(rows, tm)

    if num_blocks >= 3:
        # 3-deep input pipeline keeps DMA engines saturated on v7x (each grid
        # step is only ~2-4 us there). Footprint: 2 inputs x 3 bufs + 1 output
        # x 2 bufs at ~1 MiB each ~= 8 MiB — inside v5e's 16 MiB default too.
        in_specs = [
            pl.BlockSpec((tm, width), lambda r: (r, 0),
                         pipeline_mode=pl.Buffered(3)),
            pl.BlockSpec((tm, width), lambda r: (r, 0),
                         pipeline_mode=pl.Buffered(3)),
        ]
    else:
        in_specs = [
            pl.BlockSpec((tm, width), lambda r: (r, 0)),
            pl.BlockSpec((tm, width), lambda r: (r, 0)),
        ]

    out_2d = pl.pallas_call(
        _testnet2_kernel,
        out_shape=jax.ShapeDtypeStruct((rows, width), x1.dtype),
        grid=(num_blocks,),
        in_specs=in_specs,
        out_specs=pl.BlockSpec((tm, width), lambda r: (r, 0)),
        compiler_params=pltpu.CompilerParams(
            dimension_semantics=("parallel",),   # shard across v7x's 2 TCs
            vmem_limit_bytes=32 << 20,           # explicit headroom, <= physical on all gens
        ),
    )(x1_2d, x2_2d)

    return out_2d.reshape(orig_shape)


if __name__ == "__main__":
    key = jax.random.PRNGKey(0)
    k1, k2 = jax.random.split(key)
    # NCHW: batch=2, channels=4, spatial=16x16
    x1 = jax.random.normal(k1, (2, 4, 16, 16), dtype=jnp.float32)
    x2 = jax.random.normal(k2, (2, 4, 16, 16), dtype=jnp.float32)

    out = jax.block_until_ready(testnet2_forward(x1, x2))

    # Reference check against the closed form: x1 + 6*x2 + 31
    ref = x1 + 6.0 * x2 + 31.0
    assert out.shape == x1.shape
    assert out.dtype == x1.dtype
    assert jnp.allclose(out, ref, atol=1e-5, rtol=1e-5), "mismatch vs reference"

    print("KERNEL_OK")
</pallas_src>

<mosaic_0001>
module attributes {stable_mosaic.version = 11 : i64} {
  func.func @_testnet2_kernel(%arg0: i32, %arg1: memref<8x256xf32, #tpu.memory_space<vmem>>, %arg2: memref<8x256xf32, #tpu.memory_space<vmem>>, %arg3: memref<8x256xf32, #tpu.memory_space<vmem>>) attributes {dimension_semantics = [#tpu.dimension_semantics<parallel>], iteration_bounds = array<i64: 1>, scalar_prefetch = 0 : i64, scratch_operands = 0 : i64, tpu.core_type = #tpu.core_type<tc>, window_params = [{transform_indices = @transform_0, window_bounds = array<i64: 8, 256>}, {transform_indices = @transform_1, window_bounds = array<i64: 8, 256>}, {transform_indices = @transform_2, window_bounds = array<i64: 8, 256>}]} {
    %c0 = arith.constant 0 : index
    %c0_0 = arith.constant 0 : index
    %0 = vector.load %arg1[%c0, %c0_0] : memref<8x256xf32, #tpu.memory_space<vmem>>, vector<8x256xf32>
    %c0_1 = arith.constant 0 : index
    %c0_2 = arith.constant 0 : index
    %1 = vector.load %arg2[%c0_1, %c0_2] : memref<8x256xf32, #tpu.memory_space<vmem>>, vector<8x256xf32>
    %cst = arith.constant 6.000000e+00 : f32
    %2 = vector.broadcast %cst : f32 to vector<8x256xf32>
    %3 = arith.mulf %1, %2 : vector<8x256xf32>
    %4 = arith.addf %0, %3 : vector<8x256xf32>
    %cst_3 = arith.constant 3.100000e+01 : f32
    %5 = vector.broadcast %cst_3 : f32 to vector<8x256xf32>
    %6 = arith.addf %4, %5 : vector<8x256xf32>
    %c0_4 = arith.constant 0 : index
    %c0_5 = arith.constant 0 : index
    %7 = vector.load %arg3[%c0_4, %c0_5] : memref<8x256xf32, #tpu.memory_space<vmem>>, vector<8x256xf32>
    tpu.vector_store %arg3[%c0_4, %c0_5], %6 {strides = array<i32>} : memref<8x256xf32, #tpu.memory_space<vmem>>, vector<8x256xf32>,
    return
  }
  func.func @transform_0(%arg0: i32) -> (i32, i32) {
    %c0_i32 = arith.constant 0 : i32
    %c0_i32_0 = arith.constant 0 : i32
    return %arg0, %c0_i32 : i32, i32
  }
  func.func @transform_1(%arg0: i32) -> (i32, i32) {
    %c0_i32 = arith.constant 0 : i32
    %c0_i32_0 = arith.constant 0 : i32
    return %arg0, %c0_i32 : i32, i32
  }
  func.func @transform_2(%arg0: i32) -> (i32, i32) {
    %c0_i32 = arith.constant 0 : i32
    %c0_i32_0 = arith.constant 0 : i32
    return %arg0, %c0_i32 : i32, i32
  }
}

</mosaic_0001>

<llo_original>
// kernel: testnet2_forward.1
$region0: #{testnet2_forward.1}
  #allocation0 [shape = 'u32[]', space=smem, size = 0x4, offset = 0x4, fixed_abs, tag = 'smem constant byte address 0x4 - core index']
  #allocation1 [shape = 'u32[144,128]{1,0:T(1,128)}', space=vmem, size = 0x12000, scoped, tag = 'internal scratch']
  %s0 = inlined_call_operand.vmem [shape: f32[8,256], index: 0, kind: input, shape index: {}]
  %s1 = inlined_call_operand.vmem [shape: f32[8,256], index: 1, kind: input, shape index: {}]
  %s2 = inlined_call_operand.vmem [shape: f32[8,256], index: 2, kind: output, shape index: {}]
  %s3 = sld [smem:[#allocation0]]
  $region18: #{testnet2_forward.1} parent=0
    _
  %s5 = ssub.s32 1, %s3
  %s6 = scalar_select 0, %s5, %s3
  // Predicated region
  $region2: #{testnet2_forward.1} parent=0 // pred_check
    _
  $region3: #{testnet2_forward.1} parent=0 // pred_check_branch
    %8 = sbr.rel (0) target = $region5
  $region4: #{testnet2_forward.1} parent=0 // pred_region
    _
  $region5: #{testnet2_forward.1} parent=0 // pred_fallthru
    _
  // Predicated region
  $region6: #{testnet2_forward.1} parent=0 // pred_check
    _
  $region7: #{testnet2_forward.1} parent=0 // pred_check_branch
    %10 = sbr.rel (0) target = $region9
  $region8: #{testnet2_forward.1} parent=0 // pred_region
    _
  $region9: #{testnet2_forward.1} parent=0 // pred_fallthru
    _
  %v11 = vld [vmem:[%s0] sm:$0xff]
  %v12 = vld [vmem:[%s0 + $0x8] sm:$0xff]
  %v13 = vld [vmem:[%s1] sm:$0xff]
  %v14 = vld [vmem:[%s1 + $0x8] sm:$0xff]
  %v15 = vmul.f32 %v13, 6.0
  %v16 = vmul.f32 %v14, 6.0
  %v17 = vadd.f32 %v11, %v15
  %v18 = vadd.f32 %v12, %v16
  %v19 = vadd.f32 %v17, 31.0
  %v20 = vadd.f32 %v18, 31.0
  %21 = vst [vmem:[%s2] sm:$0xff] %v19
  %22 = vst [vmem:[%s2 + $0x8] sm:$0xff] %v20
  // Predicated region
  $region10: #{testnet2_forward.1} parent=0 // pred_check
    _
  $region11: #{testnet2_forward.1} parent=0 // pred_check_branch
    %24 = sbr.rel (0) target = $region13
  $region12: #{testnet2_forward.1} parent=0 // pred_region
    _
  $region13: #{testnet2_forward.1} parent=0 // pred_fallthru
    _
  // Predicated region
  $region14: #{testnet2_forward.1} parent=0 // pred_check
    _
  $region15: #{testnet2_forward.1} parent=0 // pred_check_branch
    %26 = sbr.rel (0) target = $region17
  $region16: #{testnet2_forward.1} parent=0 // pred_region
    _
  $region17: #{testnet2_forward.1} parent=0 // pred_fallthru
    _

</llo_original>
